<compile_context>
chip_gen: v5e
topology: v5e:2x2
jax: 0.10.0
libtpu: 0.0.40
codegen_flags: <defaults>
</compile_context>

<pallas_src>
import functools

import jax
import jax.numpy as jnp
from jax.experimental import pallas as pl
from jax.experimental.pallas import tpu as pltpu


_WEIGHT_IMBALANCE = 10.0
_WEIGHT_MSE = 1.0


def _sse_kernel(pred_ref, target_ref, out_ref, *,
                block_rows, lane, rows, tiles_per_split, all_clean):
    """Accumulates per-lane partial sum-of-squared-errors into out_ref."""
    c = pl.program_id(0)          # core-split index ("parallel")
    k = pl.program_id(1)          # streaming reduction index ("arbitrary")

    @pl.when(k == 0)
    def _init():
        out_ref[...] = jnp.zeros_like(out_ref)

    def _accumulate(mask_rows):
        p = pred_ref[...].astype(jnp.float32)
        t = target_ref[...].astype(jnp.float32)
        diff = p - t
        if mask_rows:
            # Zero overhanging / duplicated rows BEFORE squaring so any
            # garbage (even NaN) read past the real data contributes nothing.
            g = c * tiles_per_split + k
            row_ids = (jax.lax.broadcasted_iota(jnp.int32, diff.shape, 0)
                       + g * block_rows)
            diff = jnp.where(row_ids < rows, diff, 0.0)
        sq = diff * diff
        # Pure VALU accumulation into a vreg-shaped partial (block_rows is a
        # multiple of 8, so the reshape is a free leading-axis split).  The
        # cross-lane (XLU) reduce happens once, in the wrapper.
        partial = jnp.sum(sq.reshape(block_rows // 8, 8, lane), axis=0)
        out_ref[...] += partial[None]

    if all_clean:
        _accumulate(False)
    else:
        g = c * tiles_per_split + k
        is_clean = (g + 1) * block_rows <= rows

        @pl.when(is_clean)
        def _steady():
            _accumulate(False)

        @pl.when(jnp.logical_not(is_clean))
        def _dirty():
            _accumulate(True)


def _choose_layout(total, itemsize):
    """Lane-dense 2-D layout + byte-based tile size for the streaming SSE."""
    lane = 128
    rows = total // lane              # multiple-of-128 prefix; tail in wrapper
    if rows < 8:
        return None                   # too small for a useful kernel
    # Sublane alignment that keeps packed sub-32-bit layouts clean.
    pack = max(8, 32 // itemsize)     # f32 -> 8, bf16 -> 16, int8/fp8 -> 32
    align = pack if rows >= pack else 8
    # ~4 MiB per input tile (2 inputs x 2 buffers x 4 MiB = 16 MiB pipeline),
    # capped at 8192 rows to bound per-step code size.
    target_tile_bytes = 4 * 1024 * 1024
    block_rows = min(target_tile_bytes // (lane * itemsize), 8192, rows)
    block_rows = max(align, (block_rows // align) * align)
    num_tiles = -(-rows // block_rows)
    return lane, rows, block_rows, num_tiles


@functools.partial(jax.jit, static_argnames=("debug",))
def _combine_loss_impl(pred, target, flow, debug=False):
    weight_imbalance = jnp.float32(_WEIGHT_IMBALANCE)
    weight_mse = jnp.float32(_WEIGHT_MSE)

    total = pred.size
    flat_p = pred.reshape(-1)
    flat_t = target.reshape(-1)
    itemsize = jnp.dtype(pred.dtype).itemsize

    layout = _choose_layout(total, itemsize)
    if layout is None:
        # Tiny input: not worth a kernel launch.
        d = flat_p.astype(jnp.float32) - flat_t.astype(jnp.float32)
        sse = jnp.sum(d * d)
    else:
        lane, rows, block_rows, num_tiles = layout
        total_main = rows * lane

        # Split across TensorCores only when each split gets >= 2 tiles so the
        # per-core DMA/compute pipeline still overlaps (v5e/v6e: serial loop).
        num_splits = 2 if num_tiles >= 4 else 1
        tiles_per_split = -(-num_tiles // num_splits)
        all_clean = (rows % block_rows == 0
                     and num_splits * tiles_per_split == num_tiles)

        # TODO(synk): when total % 128 != 0 this prefix slice may cost XLA one
        # copy of the prefix; still no worse than the previous full jnp.pad.
        p2 = flat_p[:total_main].reshape(rows, lane)
        t2 = flat_t[:total_main].reshape(rows, lane)

        if num_splits * tiles_per_split > num_tiles:
            # Odd tile count: the last grid point of the last split is a
            # duplicate of the final tile (clamped here, fully masked in-kernel).
            def row_map(c, k):
                return (jnp.minimum(c * tiles_per_split + k, num_tiles - 1), 0)
        else:
            def row_map(c, k):
                return (c * tiles_per_split + k, 0)

        data_spec = pl.BlockSpec((block_rows, lane), row_map)
        out_spec = pl.BlockSpec((1, 8, lane), lambda c, k: (c, 0, 0))

        kernel = functools.partial(
            _sse_kernel,
            block_rows=block_rows, lane=lane, rows=rows,
            tiles_per_split=tiles_per_split, all_clean=all_clean)

        partials = pl.pallas_call(
            kernel,
            out_shape=jax.ShapeDtypeStruct((num_splits, 8, lane), jnp.float32),
            grid_spec=pltpu.PrefetchScalarGridSpec(
                num_scalar_prefetch=0,
                grid=(num_splits, tiles_per_split),
                in_specs=[data_spec, data_spec],
                out_specs=out_spec,
            ),
            compiler_params=pltpu.CompilerParams(
                dimension_semantics=("parallel", "arbitrary"),
                vmem_limit_bytes=32 * 1024 * 1024,
            ),
            cost_estimate=pl.CostEstimate(
                flops=3 * int(total_main),
                transcendentals=0,
                bytes_accessed=int(2 * total_main * itemsize
                                   + num_splits * 8 * lane * 4),
            ),
        )(p2, t2)

        sse = jnp.sum(partials)
        if total_main < total:
            # <128-element tail: tiny wrapper-side sum instead of padding HBM.
            tail_d = (flat_p[total_main:].astype(jnp.float32)
                      - flat_t[total_main:].astype(jnp.float32))
            sse = sse + jnp.sum(tail_d * tail_d)

    mse = sse / jnp.float32(total)

    # Mass-conservation imbalance of the tiny (N, N) flow matrix, done in the
    # wrapper (removes the flow DMA + in-kernel transpose entirely).
    f = flow.astype(jnp.float32)
    imbalance = jnp.sum(jnp.abs(jnp.sum(f, axis=1) - jnp.sum(f, axis=0)))

    loss = weight_imbalance * imbalance + weight_mse * mse

    if debug:
        # TODO(synk): the PyTorch module prints on every call (host sync);
        # reproduced only behind debug=True via jax.debug.print.
        jax.debug.print("imbalance: {}, mse: {}, loss: {}",
                        weight_imbalance * imbalance, weight_mse * mse, loss)

    imbalance_ratio = weight_imbalance * imbalance / loss
    mse_ratio = weight_mse * mse / loss
    # Returned as device scalars (no .item() host sync).
    return loss, imbalance_ratio, mse_ratio


def combine_loss_forward(pred, target, flow, c_flow, alpha=0.5, beta=0.5,
                         log_vars=None, debug=False):
    """JAX/Pallas equivalent of Combine_loss.forward."""
    del c_flow, alpha, beta, log_vars   # unused by the reference forward
    return _combine_loss_impl(pred, target, flow, debug=debug)


def _reference(pred, target, flow):
    p = pred.astype(jnp.float32)
    t = target.astype(jnp.float32)
    f = flow.astype(jnp.float32)
    ref_mse = jnp.mean((p - t) ** 2)
    ref_imb = jnp.sum(jnp.abs(jnp.sum(f, axis=1) - jnp.sum(f, axis=0)))
    ref_loss = _WEIGHT_IMBALANCE * ref_imb + _WEIGHT_MSE * ref_mse
    return (ref_loss,
            _WEIGHT_IMBALANCE * ref_imb / ref_loss,
            _WEIGHT_MSE * ref_mse / ref_loss)


def _check(pred, target, flow, c_flow, rtol=2e-3):
    loss, imb_ratio, mse_ratio = combine_loss_forward(pred, target, flow, c_flow)
    jax.block_until_ready((loss, imb_ratio, mse_ratio))
    ref_loss, ref_ir, ref_mr = _reference(pred, target, flow)
    assert abs(float(loss) - float(ref_loss)) <= rtol * max(1.0, abs(float(ref_loss)))
    assert abs(float(imb_ratio) - float(ref_ir)) <= rtol
    assert abs(float(mse_ratio) - float(ref_mr)) <= rtol
    return loss


if __name__ == "__main__":
    key = jax.random.PRNGKey(0)
    k_pred, k_target, k_flow, k_cflow = jax.random.split(key, 4)

    # Primary shapes implied by the module (NCHW pred/target, square flow).
    B, C, H, W = 2, 4, 16, 16
    N = 16

    pred = jax.random.normal(k_pred, (B, C, H, W), dtype=jnp.float32)
    target = jax.random.normal(k_target, (B, C, H, W), dtype=jnp.float32)
    flow = jax.random.uniform(k_flow, (N, N), dtype=jnp.float32)
    c_flow = jax.random.uniform(k_cflow, (N, N), dtype=jnp.float32)

    # nn.Parameter(torch.zeros(2)) -> deterministic zeros (unused in forward).
    log_vars = jnp.zeros((2,), dtype=jnp.float32)

    loss, imb_ratio, mse_ratio = combine_loss_forward(
        pred, target, flow, c_flow, alpha=0.5, beta=0.5, log_vars=log_vars)
    jax.block_until_ready((loss, imb_ratio, mse_ratio))

    ref_loss, ref_ir, ref_mr = _reference(pred, target, flow)
    assert abs(float(loss) - float(ref_loss)) < 1e-3 * max(1.0, abs(float(ref_loss)))
    assert abs(float(imb_ratio) - float(ref_ir)) < 1e-3
    assert abs(float(mse_ratio) - float(ref_mr)) < 1e-3

    # Multi-tile path: 4 tiles, 2-way core split, fully clean (no masking).
    kp2, kt2 = jax.random.split(jax.random.PRNGKey(1))
    pred2 = jax.random.normal(kp2, (16, 8, 128, 256), dtype=jnp.float32)
    target2 = jax.random.normal(kt2, (16, 8, 128, 256), dtype=jnp.float32)
    _check(pred2, target2, flow, c_flow)

    # Odd tile count: 5 tiles over 2 splits -> clamped duplicate tile + mask.
    kp4, kt4 = jax.random.split(jax.random.PRNGKey(3))
    pred4 = jax.random.normal(kp4, (5, 8, 128, 1024), dtype=jnp.float32)
    target4 = jax.random.normal(kt4, (5, 8, 128, 1024), dtype=jnp.float32)
    _check(pred4, target4, flow, c_flow)

    # Native bf16, element count not a multiple of 128: masked last tile +
    # wrapper-side tail sum (no jnp.pad of the inputs).
    kp3, kt3 = jax.random.split(jax.random.PRNGKey(2))
    pred3 = jax.random.normal(kp3, (2, 3, 100, 100), dtype=jnp.bfloat16)
    target3 = jax.random.normal(kt3, (2, 3, 100, 100), dtype=jnp.bfloat16)
    _check(pred3, target3, flow, c_flow, rtol=5e-3)

    print("KERNEL_OK")
</pallas_src>

<mosaic_0001>
module attributes {stable_mosaic.version = 11 : i64} {
  func.func @_sse_kernel(%arg0: i32, %arg1: i32, %arg2: memref<16x128xf32, #tpu.memory_space<vmem>>, %arg3: memref<16x128xf32, #tpu.memory_space<vmem>>, %arg4: memref<1x8x128xf32, #tpu.memory_space<vmem>>) attributes {dimension_semantics = [#tpu.dimension_semantics<parallel>, #tpu.dimension_semantics<arbitrary>], iteration_bounds = array<i64: 1, 1>, scalar_prefetch = 0 : i64, scratch_operands = 0 : i64, tpu.core_type = #tpu.core_type<tc>, window_params = [{transform_indices = @transform_0, window_bounds = array<i64: 16, 128>}, {transform_indices = @transform_1, window_bounds = array<i64: 16, 128>}, {transform_indices = @transform_2, window_bounds = array<i64: 1, 8, 128>}]} {
    %c0_i32 = arith.constant 0 : i32
    %0 = arith.cmpi eq, %arg1, %c0_i32 : i32
    %1 = arith.extui %0 : i1 to i32
    %c0_i32_0 = arith.constant 0 : i32
    %2 = arith.cmpi ne, %1, %c0_i32_0 : i32
    scf.if %2 {
      %cst_10 = arith.constant 0.000000e+00 : f32
      %13 = vector.broadcast %cst_10 : f32 to vector<1x8x128xf32>
      %c0_11 = arith.constant 0 : index
      %c0_12 = arith.constant 0 : index
      %c0_13 = arith.constant 0 : index
      %14 = vector.load %arg4[%c0_11, %c0_12, %c0_13] : memref<1x8x128xf32, #tpu.memory_space<vmem>>, vector<1x8x128xf32>
      tpu.vector_store %arg4[%c0_11, %c0_12, %c0_13], %13 {strides = array<i32>} : memref<1x8x128xf32, #tpu.memory_space<vmem>>, vector<1x8x128xf32>,
    } else {
    }
    %c0 = arith.constant 0 : index
    %c0_1 = arith.constant 0 : index
    %3 = vector.load %arg2[%c0, %c0_1] : memref<16x128xf32, #tpu.memory_space<vmem>>, vector<16x128xf32>
    %c0_2 = arith.constant 0 : index
    %c0_3 = arith.constant 0 : index
    %4 = vector.load %arg3[%c0_2, %c0_3] : memref<16x128xf32, #tpu.memory_space<vmem>>, vector<16x128xf32>
    %5 = arith.subf %3, %4 : vector<16x128xf32>
    %6 = arith.mulf %5, %5 : vector<16x128xf32>
    %7 = vector.shape_cast %6 : vector<16x128xf32> to vector<2x8x128xf32>
    %cst = arith.constant dense<0.000000e+00> : vector<8x128xf32>
    %8 = vector.multi_reduction <add>, %7, %cst [0] : vector<2x8x128xf32> to vector<8x128xf32>
    %c0_4 = arith.constant 0 : index
    %c0_5 = arith.constant 0 : index
    %c0_6 = arith.constant 0 : index
    %9 = vector.load %arg4[%c0_4, %c0_5, %c0_6] : memref<1x8x128xf32, #tpu.memory_space<vmem>>, vector<1x8x128xf32>
    %10 = vector.shape_cast %8 : vector<8x128xf32> to vector<1x8x128xf32>
    %11 = arith.addf %9, %10 : vector<1x8x128xf32>
    %c0_7 = arith.constant 0 : index
    %c0_8 = arith.constant 0 : index
    %c0_9 = arith.constant 0 : index
    %12 = vector.load %arg4[%c0_7, %c0_8, %c0_9] : memref<1x8x128xf32, #tpu.memory_space<vmem>>, vector<1x8x128xf32>
    tpu.vector_store %arg4[%c0_7, %c0_8, %c0_9], %11 {strides = array<i32>} : memref<1x8x128xf32, #tpu.memory_space<vmem>>, vector<1x8x128xf32>,
    return
  }
  func.func @transform_0(%arg0: i32, %arg1: i32) -> (i32, i32) {
    %c1_i32 = arith.constant 1 : i32
    %0 = arith.muli %arg0, %c1_i32 : i32
    %1 = arith.addi %0, %arg1 : i32
    %c0_i32 = arith.constant 0 : i32
    %c0_i32_0 = arith.constant 0 : i32
    return %1, %c0_i32 : i32, i32
  }
  func.func @transform_1(%arg0: i32, %arg1: i32) -> (i32, i32) {
    %c1_i32 = arith.constant 1 : i32
    %0 = arith.muli %arg0, %c1_i32 : i32
    %1 = arith.addi %0, %arg1 : i32
    %c0_i32 = arith.constant 0 : i32
    %c0_i32_0 = arith.constant 0 : i32
    return %1, %c0_i32 : i32, i32
  }
  func.func @transform_2(%arg0: i32, %arg1: i32) -> (i32, i32, i32) {
    %c0_i32 = arith.constant 0 : i32
    %c0_i32_0 = arith.constant 0 : i32
    %c0_i32_1 = arith.constant 0 : i32
    return %arg0, %c0_i32, %c0_i32_0 : i32, i32, i32
  }
}

</mosaic_0001>

<llo_original>
// kernel: _combine_loss_impl.1
$region0: #{_combine_loss_impl.1}
  #allocation0 [shape = 'u32[]', space=smem, size = 0x4, offset = 0x4, fixed_abs, tag = 'smem constant byte address 0x4 - core index']
  #allocation1 [shape = 'u32[72,128]{1,0:T(1,128)}', space=vmem, size = 0x9000, scoped, tag = 'internal scratch']
  %s0 = inlined_call_operand.vmem [shape: f32[16,128], index: 0, kind: input, shape index: {}]
  %s1 = inlined_call_operand.vmem [shape: f32[16,128], index: 1, kind: input, shape index: {}]
  %s2 = inlined_call_operand.vmem [shape: f32[1,8,128], index: 2, kind: output, shape index: {}]
  %s3 = sld [smem:[#allocation0]]
  $region22: #{_combine_loss_impl.1} parent=0
    _
  %s5 = ssub.s32 1, %s3
  %s6 = scalar_select 0, %s5, %s3
  // Predicated region
  $region2: #{_combine_loss_impl.1} parent=0 // pred_check
    _
  $region3: #{_combine_loss_impl.1} parent=0 // pred_check_branch
    %8 = sbr.rel (0) target = $region5
  $region4: #{_combine_loss_impl.1} parent=0 // pred_region
    %s9 = sadd.s32 0, 0
    %s10 = smul.u32 2, %s9
    %p11 = scmp.lt.s32.totalorder %s10, 1
    %s12 = scalar_select %p11, %s10, 1
    %s13 = smul.addr %s12, 8
    %s14 = scalar_lea.vmem %s0, %s13
    %s15 = sadd.s32 0, 0
    %s16 = smul.u32 2, %s15
  $region5: #{_combine_loss_impl.1} parent=0 // pred_fallthru
    _
  // Predicated region
  $region6: #{_combine_loss_impl.1} parent=0 // pred_check
    _
  $region7: #{_combine_loss_impl.1} parent=0 // pred_check_branch
    %18 = sbr.rel (0) target = $region9
  $region8: #{_combine_loss_impl.1} parent=0 // pred_region
    %s19 = sadd.s32 0, 0
    %s20 = smul.u32 2, %s19
    %p21 = scmp.lt.s32.totalorder %s20, 1
    %s22 = scalar_select %p21, %s20, 1
    %s23 = smul.addr %s22, 8
    %s24 = scalar_lea.vmem %s1, %s23
    %s25 = sadd.s32 0, 0
    %s26 = smul.u32 2, %s25
  $region9: #{_combine_loss_impl.1} parent=0 // pred_fallthru
    _
  %s27 = sadd.s32 0, 0
  %s28 = smul.u32 2, %s27
  %p29 = scmp.lt.s32.totalorder %s28, 1
  %s30 = scalar_select %p29, %s28, 1
  %s31 = smul.addr %s30, 8
  %s32 = scalar_lea.vmem %s0, %s31
  %s33 = sadd.s32 0, 0
  %s34 = smul.u32 2, %s33
  %p35 = scmp.lt.s32.totalorder %s34, 1
  %s36 = scalar_select %p35, %s34, 1
  %s37 = smul.addr %s36, 8
  %s38 = scalar_lea.vmem %s1, %s37
  %s39 = sadd.s32 0, 0
  %s40 = smul.u32 2, %s39
  %p41 = scmp.lt.s32.totalorder %s40, 1
  %s42 = scalar_select %p41, %s40, 1
  %s43 = smul.addr %s42, 8
  %s44 = scalar_lea.vmem %s0, %s43
  %s45 = sadd.s32 0, 0
  %s46 = smul.u32 2, %s45
  %s47 = sadd.s32 0, 0
  %s48 = smul.u32 2, %s47
  %p49 = scmp.lt.s32.totalorder %s48, 1
  %s50 = scalar_select %p49, %s48, 1
  %s51 = smul.addr %s50, 8
  %s52 = scalar_lea.vmem %s1, %s51
  %s53 = sadd.s32 0, 0
  %s54 = smul.u32 2, %s53
  %p55 = scmp.eq.s32.totalorder 0, 0
  // Predicated region
  $region10: #{_combine_loss_impl.1} parent=0 // pred_check
    %p56 = pneg %p55
  $region11: #{_combine_loss_impl.1} parent=0 // pred_check_branch
    %58 = sbr.rel (%p56) target = $region13
  $region12: #{_combine_loss_impl.1} parent=0 // pred_region
    %59 = vst [vmem:[%s2] sm:$0xff] 0.0
  $region13: #{_combine_loss_impl.1} parent=0 // pred_fallthru
    _
  %v60 = vld [vmem:[%s44] sm:$0xff]
  %v61 = vld [vmem:[%s44 + $0x8] sm:$0xff]
  %v62 = vld [vmem:[%s52] sm:$0xff]
  %v63 = vld [vmem:[%s52 + $0x8] sm:$0xff]
  %v64 = vsub.f32 %v60, %v62
  %v65 = vsub.f32 %v61, %v63
  %v66 = vmul.f32 %v64, %v64
  %v67 = vmul.f32 %v65, %v65
  %v68 = vadd.f32 %v66, %v67
  %v69 = vld [vmem:[%s2] sm:$0xff]
  %v70 = vadd.f32 %v69, %v68
  %71 = vst [vmem:[%s2] sm:$0xff] %v70
  // Predicated region
  $region14: #{_combine_loss_impl.1} parent=0 // pred_check
    _
  $region15: #{_combine_loss_impl.1} parent=0 // pred_check_branch
    %73 = sbr.rel (0) target = $region17
  $region16: #{_combine_loss_impl.1} parent=0 // pred_region
    _
  $region17: #{_combine_loss_impl.1} parent=0 // pred_fallthru
    _
  // Predicated region
  $region18: #{_combine_loss_impl.1} parent=0 // pred_check
    _
  $region19: #{_combine_loss_impl.1} parent=0 // pred_check_branch
    %75 = sbr.rel (0) target = $region21
  $region20: #{_combine_loss_impl.1} parent=0 // pred_region
    _
  $region21: #{_combine_loss_impl.1} parent=0 // pred_fallthru
    _

</llo_original>
